<compile_context>
chip_gen: v7x
topology: tpu7x:2x2x1
jax: 0.10.0
libtpu: 0.0.40
codegen_flags: <defaults>
</compile_context>

<pallas_src>
import jax
import jax.numpy as jnp
from jax.experimental import pallas as pl
from jax.experimental.pallas import tpu as pltpu

_LANE = 128
_SUBLANE = 8
# Per-buffer VMEM budget for one tile. With input + output each double-buffered
# this is 4x = 8 MiB, comfortably under every generation's scoped-VMEM default,
# while large enough to sit near the HBM roofline for a pure streaming op.
_TILE_BYTES = 2 * 1024 * 1024


def _affine_kernel(x_ref, o_ref):
    # Keep the exact (x + 2) * 3 form of the PyTorch module (bit-identical to
    # the reference). The kernel is HBM-bound, so folding to x*3 + 6 would not
    # change wall-clock; we prefer exact forward-pass semantics.
    o_ref[...] = (x_ref[...] + 2.0) * 3.0


def pt_module_forward(x: jax.Array) -> jax.Array:
    orig_shape = x.shape
    n = int(x.size)
    itemsize = jnp.dtype(x.dtype).itemsize

    # Largest row-block (multiple of 8 sublanes) within the per-buffer budget.
    budget_rows = max(_SUBLANE, (_TILE_BYTES // itemsize) // _LANE)
    budget_rows -= budget_rows % _SUBLANE

    rows_needed = pl.cdiv(n, _LANE)
    if rows_needed <= budget_rows:
        # Whole (lane-padded) array in one lane-dense block; single grid step.
        block_rows = rows_needed
        total_rows = rows_needed
    else:
        # Tile the row axis; pad rows up to a multiple of the block so the
        # (8, 128)-aligned block evenly divides the slab.
        block_rows = budget_rows
        total_rows = pl.cdiv(rows_needed, block_rows) * block_rows
    num_blocks = total_rows // block_rows

    padded = total_rows * _LANE
    flat = x.reshape(-1)
    if padded != n:
        flat = jnp.pad(flat, (0, padded - n))
    x2d = flat.reshape(total_rows, _LANE)

    out2d = pl.pallas_call(
        _affine_kernel,
        out_shape=jax.ShapeDtypeStruct((total_rows, _LANE), x.dtype),
        grid=(num_blocks,),
        in_specs=[pl.BlockSpec((block_rows, _LANE), lambda i: (i, 0))],
        out_specs=pl.BlockSpec((block_rows, _LANE), lambda i: (i, 0)),
        compiler_params=pltpu.CompilerParams(
            # Row-blocks are independent: shard the streaming loop across
            # v7x's two TensorCores (no-op on single-TC v5e/v6e).
            dimension_semantics=("parallel",),
        ),
    )(x2d)

    out = out2d.reshape(-1)
    if padded != n:
        out = out[:n]
    return out.reshape(orig_shape)


if __name__ == "__main__":
    key = jax.random.PRNGKey(0)

    # Shape implied by the module's forward (NCHW batch loop).
    x = jax.random.normal(key, (2, 4, 16, 16), dtype=jnp.float32)
    out = jax.block_until_ready(pt_module_forward(x))
    ref = (x + 2.0) * 3.0
    assert out.shape == x.shape and out.dtype == x.dtype
    assert jnp.allclose(out, ref, atol=1e-6, rtol=1e-6)

    # Cheap sanity check of the lane-unaligned (padding) path.
    x2 = jax.random.normal(jax.random.PRNGKey(1), (3, 5, 7, 9), dtype=jnp.float32)
    out2 = jax.block_until_ready(pt_module_forward(x2))
    assert jnp.allclose(out2, (x2 + 2.0) * 3.0, atol=1e-6, rtol=1e-6)

    print("KERNEL_OK")
</pallas_src>

<mosaic_0001>
module attributes {stable_mosaic.version = 11 : i64} {
  func.func @_affine_kernel(%arg0: i32, %arg1: memref<16x128xf32, #tpu.memory_space<vmem>>, %arg2: memref<16x128xf32, #tpu.memory_space<vmem>>) attributes {dimension_semantics = [#tpu.dimension_semantics<parallel>], iteration_bounds = array<i64: 1>, scalar_prefetch = 0 : i64, scratch_operands = 0 : i64, tpu.core_type = #tpu.core_type<tc>, window_params = [{transform_indices = @transform_0, window_bounds = array<i64: 16, 128>}, {transform_indices = @transform_1, window_bounds = array<i64: 16, 128>}]} {
    %c0 = arith.constant 0 : index
    %c0_0 = arith.constant 0 : index
    %0 = vector.load %arg1[%c0, %c0_0] : memref<16x128xf32, #tpu.memory_space<vmem>>, vector<16x128xf32>
    %cst = arith.constant 2.000000e+00 : f32
    %1 = vector.broadcast %cst : f32 to vector<16x128xf32>
    %2 = arith.addf %0, %1 : vector<16x128xf32>
    %cst_1 = arith.constant 3.000000e+00 : f32
    %3 = vector.broadcast %cst_1 : f32 to vector<16x128xf32>
    %4 = arith.mulf %2, %3 : vector<16x128xf32>
    %c0_2 = arith.constant 0 : index
    %c0_3 = arith.constant 0 : index
    %5 = vector.load %arg2[%c0_2, %c0_3] : memref<16x128xf32, #tpu.memory_space<vmem>>, vector<16x128xf32>
    tpu.vector_store %arg2[%c0_2, %c0_3], %4 {strides = array<i32>} : memref<16x128xf32, #tpu.memory_space<vmem>>, vector<16x128xf32>,
    return
  }
  func.func @transform_0(%arg0: i32) -> (i32, i32) {
    %c0_i32 = arith.constant 0 : i32
    %c0_i32_0 = arith.constant 0 : i32
    return %arg0, %c0_i32 : i32, i32
  }
  func.func @transform_1(%arg0: i32) -> (i32, i32) {
    %c0_i32 = arith.constant 0 : i32
    %c0_i32_0 = arith.constant 0 : i32
    return %arg0, %c0_i32 : i32, i32
  }
}

</mosaic_0001>

<llo_original>
// kernel: tpu_custom_call.1
$region0: #{tpu_custom_call.1}
  #allocation0 [shape = 'u32[]', space=smem, size = 0x4, offset = 0x4, fixed_abs, tag = 'smem constant byte address 0x4 - core index']
  #allocation1 [shape = 'u32[144,128]{1,0:T(1,128)}', space=vmem, size = 0x12000, scoped, tag = 'internal scratch']
  %s0 = inlined_call_operand.hbm [shape: f32[16,128], index: 0, kind: input, shape index: {}]
  %s1 = inlined_call_operand.hbm [shape: f32[16,128], index: 1, kind: output, shape index: {}]
  %s2 = sld [smem:[#allocation0]]
  $region18: #{tpu_custom_call.1} parent=0
    _
  %s4 = ssub.s32 1, %s2
  %s5 = scalar_select 0, %s4, %s2
  $region1: #{tpu_custom_call.1} parent=0
    #allocation2 [shape = 'u8[8192]{0}', space=vmem, size = 0x2000, scoped, tag = 'input window, operand 0, single buffered']
    #allocation3 [shape = 's32[1]{0}', space=sflag, size = 0x4, scoped, tag = 'scoped memory for tpu_custom_call.1']
    #allocation4 [shape = 's32[1]{0}', space=sflag, size = 0x4, scoped, tag = 'scoped memory for tpu_custom_call.1']
    #allocation5 [shape = 'u8[8192]{0}', space=vmem, size = 0x2000, scoped, tag = 'output window, operand 0, single buffered']
    %6 = vsyncpa [#allocation3], 0
    %7 = vsyncpa [#allocation4], 0
    // Predicated region
    $region2: #{tpu_custom_call.1} parent=1 // pred_check
      _
    $region3: #{tpu_custom_call.1} parent=1 // pred_check_branch
      %9 = sbr.rel (0) target = $region5
    $region4: #{tpu_custom_call.1} parent=1 // pred_region
      %s11 = ssub.s32 256, 256
      %12 = vsyncadd [#allocation3], %s11
      %s13 = sshll.u32 [#allocation2], 4
      %s14 = int_to_ptr.vmem [resolvable:$true] %s13
      %19 = dma.hbm_to_vmem [thread:$0]  %s0, 256, %s14, [#allocation3], 128, 128, 8
    $region5: #{tpu_custom_call.1} parent=1 // pred_fallthru
      _
    // Predicated region
    $region6: #{tpu_custom_call.1} parent=1 // pred_check
      _
    $region7: #{tpu_custom_call.1} parent=1 // pred_check_branch
      %21 = sbr.rel (0) target = $region9
    $region8: #{tpu_custom_call.1} parent=1 // pred_region
      %22 = dma.done [#allocation3], 256
    $region9: #{tpu_custom_call.1} parent=1 // pred_fallthru
      _
    %v23 = vld [vmem:[#allocation2] sm:$0xff]
    %v24 = vld [vmem:[#allocation2 + $0x8] sm:$0xff]
    %v25 = vadd.f32 %v23, 2.0
    %v26 = vadd.f32 %v24, 2.0
    %v27 = vmul.f32 %v25, 3.0
    %v28 = vmul.f32 %v26, 3.0
    %29 = vst [vmem:[#allocation5] sm:$0xff] %v27
    %30 = vst [vmem:[#allocation5 + $0x8] sm:$0xff] %v28
    // Predicated region
    $region10: #{tpu_custom_call.1} parent=1 // pred_check
      _
    $region11: #{tpu_custom_call.1} parent=1 // pred_check_branch
      %32 = sbr.rel (0) target = $region13
    $region12: #{tpu_custom_call.1} parent=1 // pred_region
      %s34 = ssub.s32 256, 256
      %35 = vsyncadd [#allocation4], %s34
      %s36 = sshll.u32 [#allocation5], 4
      %s37 = int_to_ptr.vmem [resolvable:$true] %s36
      %42 = dma.vmem_to_hbm [thread:$0]  %s37, 256, %s1, [#allocation4], 128, 128, 8
    $region13: #{tpu_custom_call.1} parent=1 // pred_fallthru
      _
    // Predicated region
    $region14: #{tpu_custom_call.1} parent=1 // pred_check
      _
    $region15: #{tpu_custom_call.1} parent=1 // pred_check_branch
      %44 = sbr.rel (0) target = $region17
    $region16: #{tpu_custom_call.1} parent=1 // pred_region
      %45 = dma.done [#allocation4], 256
    $region17: #{tpu_custom_call.1} parent=1 // pred_fallthru
      _
    %46 = vsyncpa [#allocation3], 1
    %47 = vsyncpa [#allocation4], 1

</llo_original>
